<compile_context>
chip_gen: v7x
topology: tpu7x:2x2x1
jax: 0.10.0
libtpu: 0.0.40
codegen_flags: <defaults>
</compile_context>

<pallas_src>
import functools

import jax
import jax.numpy as jnp
from jax import lax
from jax.experimental import pallas as pl
from jax.experimental.pallas import tpu as pltpu

LANES = 128
SUBLANES = 8


def _bce_logits_kernel(pred_ref, label_ref, out_ref, *,
                       tiles_per_split, num_splits, num_tiles,
                       tile_elems, tail_valid, acc_chains, bf16_eup):
    """Per-split partial sums of stable BCE-with-logits losses.

    Grid = (split, tile-in-split). out_ref is a (1, acc_chains, 8, 128) block resident
    across the tile axis and indexed by the split axis.
    """
    c = pl.program_id(0)            # split axis (CORE_PARALLEL on v7x, size 1 elsewhere)
    i = pl.program_id(1)            # sequential tile axis within the split
    t = c * tiles_per_split + i     # global tile index (small int, no overflow)

    @pl.when(i == 0)
    def _():
        out_ref[...] = jnp.zeros_like(out_ref)

    x = pred_ref[...].astype(jnp.float32)
    y = label_ref[...].astype(jnp.float32)
    neg_abs = -jnp.abs(x)
    if bf16_eup:
        # v7x + bf16 inputs only: exp/log1p at the EUP's 2x bf16 rate. |softplus| <= log(2),
        # so the absolute error stays ~1e-3; accumulation stays f32.
        softplus = jnp.log1p(jnp.exp(neg_abs.astype(jnp.bfloat16))).astype(jnp.float32)
    else:
        softplus = jnp.log1p(jnp.exp(neg_abs))
    # PyTorch's numerically stable formulation: max(x,0) - x*y + log1p(exp(-|x|))
    loss = jnp.maximum(x, 0.0) - x * y + softplus

    def accumulate(vals):
        # (block_rows, 128) -> (acc_chains, n_per, 8, 128) splits exactly on vreg tile
        # boundaries (free). The axis=1 sums are `acc_chains` independent accumulation
        # chains (each block_rows/(8*acc_chains) deep), keeping the 4 VALU slots fed
        # instead of one long serial vadd chain. Cross-lane reduce deferred to wrapper.
        part = vals.reshape(acc_chains, -1, SUBLANES, LANES).sum(axis=1)
        out_ref[...] += part[None]

    last_t = num_tiles - 1
    ragged_last = tail_valid < tile_elems                    # static Python bool
    has_oob = num_splits * tiles_per_split > num_tiles       # static Python bool

    if not ragged_last and not has_oob:
        # Hot path: every tile is fully valid, no masking anywhere.
        accumulate(loss)
    else:
        @pl.when(t < last_t)
        def _():
            accumulate(loss)

        @pl.when(t == last_t)
        def _():
            if ragged_last:
                # NOTE: `loss` holds garbage on the unfetched (stale-VMEM) region of the
                # partial last block. jnp.where is a SELECT, so that garbage (even Inf/NaN)
                # never reaches the sum. Do NOT refactor this into `loss * mask`.
                row = lax.broadcasted_iota(jnp.int32, loss.shape, 0)
                col = lax.broadcasted_iota(jnp.int32, loss.shape, 1)
                in_tile = row * LANES + col
                accumulate(jnp.where(in_tile < tail_valid, loss, 0.0))
            else:
                accumulate(loss)
        # t > last_t: padding step from an uneven split -> contributes nothing.


def _align_pred_label_batch_size(pred, label):
    # Mirrors LossFunc.align_pred_label_batch_size: silently truncate to the smaller batch.
    # (Intentional API behavior from the reference module, unlike torch.nn.BCEWithLogitsLoss
    #  which would raise on mismatched shapes.)
    pred_size, label_size = pred.shape[0], label.shape[0]
    if pred_size == label_size:
        return pred, label
    smaller = min(pred_size, label_size)
    return pred[:smaller], label[:smaller]


def _round_up(x, m):
    return ((x + m - 1) // m) * m


def _device_kind():
    try:
        return jax.devices()[0].device_kind.lower()
    except Exception:
        return ""


def _default_block_rows():
    kind = _device_kind()
    # 8192x128 f32 = 4 MiB/tile; 2 inputs x 2 pipeline buffers = 16 MiB, which fits the
    # 32 MiB scoped-VMEM default of v6e/v7x but would exactly hit v5e's 16 MiB default.
    # Older generations therefore stay at 4096 (8 MiB double-buffered, ~94% of the v5e
    # HBM roofline), v6e/v7x get 8192 to amortize the ~0.35us fixed per-step cost.
    if ("v6" in kind) or ("v7" in kind):
        return 8192
    return 4096


def _default_num_splits():
    # Only v7x has 2 TensorCores per chip; on single-TC chips a split axis only adds a
    # padded grid step (redundant clamped DMA) and extra index work.
    return 2 if "v7" in _device_kind() else 1


def _auto_bf16_eup(pred_dtype, label_dtype):
    # Worth it only where the EUP can become the ceiling: bf16 inputs on v7x.
    # (v5e has no bf16 EUP; on f32 inputs the kernel stays HBM-bound everywhere.)
    if "v7" not in _device_kind():
        return False
    return (jnp.dtype(pred_dtype) == jnp.dtype(jnp.bfloat16)
            and jnp.dtype(label_dtype) == jnp.dtype(jnp.bfloat16))


def bce_with_logits_loss(pred, label, *, block_rows=None, num_splits=None, bf16_eup=None):
    """Mean BCE-with-logits loss over all elements (PyTorch BCEWithLogitsLoss, mean)."""
    pred, label = _align_pred_label_batch_size(pred, label)
    assert pred.shape == label.shape, "pred/label must match after batch alignment"

    n_valid = int(pred.size)
    assert n_valid > 0

    if block_rows is None:
        block_rows = _default_block_rows()
    if num_splits is None:
        num_splits = _default_num_splits()
    if bf16_eup is None:
        bf16_eup = _auto_bf16_eup(pred.dtype, label.dtype)

    # Stream native dtype; cast to f32 inside the kernel (free on the VPU).
    pred_f = jnp.ravel(pred)
    label_f = jnp.ravel(label)

    # Sublane multiple required by the narrowest input dtype (f32->8, bf16/f16->16, 8-bit->32).
    min_itemsize = min(pred.dtype.itemsize, label.dtype.itemsize)
    sub_mult = max(SUBLANES, 32 // max(1, min_itemsize))

    # 128-aligned sizes (common case): no pad -> the reshape below is a pure bitcast, zero
    # wrapper-side HBM traffic. Otherwise pad only to lane alignment (never to a full block);
    # the ragged last tile is masked in-kernel.
    padded_n = max(_round_up(n_valid, LANES), sub_mult * LANES)
    pad = padded_n - n_valid
    if pad:
        pred_f = jnp.pad(pred_f, (0, pad))
        label_f = jnp.pad(label_f, (0, pad))

    rows = padded_n // LANES
    pred2d = pred_f.reshape(rows, LANES)
    label2d = label_f.reshape(rows, LANES)

    # Tile sizing: <= rows, multiple of sub_mult.
    block_rows = max(sub_mult, (min(block_rows, rows) // sub_mult) * sub_mult)
    tile_elems = block_rows * LANES
    num_tiles = pl.cdiv(rows, block_rows)
    tail_valid = n_valid - (num_tiles - 1) * tile_elems   # static, 1..tile_elems

    num_splits = max(1, min(num_splits, num_tiles))
    tiles_per_split = pl.cdiv(num_tiles, num_splits)

    # Independent accumulation chains inside the resident output block (largest power of
    # two <= 8 that divides the number of vreg-rows per tile).
    n_vregs = block_rows // SUBLANES
    acc_chains = 1
    for cand in (8, 4, 2):
        if n_vregs % cand == 0:
            acc_chains = cand
            break

    kernel = functools.partial(
        _bce_logits_kernel,
        tiles_per_split=tiles_per_split,
        num_splits=num_splits,
        num_tiles=num_tiles,
        tile_elems=tile_elems,
        tail_valid=tail_valid,
        acc_chains=acc_chains,
        bf16_eup=bf16_eup,
    )

    needs_clamp = num_splits * tiles_per_split > num_tiles   # static
    if needs_clamp:
        def in_map(c, i):
            # The (at most one) padding step of an uneven split DMAs an in-bounds block;
            # its contribution is skipped inside the kernel.
            return (jnp.minimum(c * tiles_per_split + i, num_tiles - 1), 0)
    else:
        def in_map(c, i):
            return (c * tiles_per_split + i, 0)

    if num_splits > 1:
        # v7x only: shard the split axis across the two TensorCores so both stream
        # (plain "parallel" barely changes codegen per the Mosaic docs).
        dims = (getattr(pltpu, "CORE_PARALLEL", pltpu.PARALLEL), pltpu.ARBITRARY)
    else:
        dims = ("arbitrary", "arbitrary")

    cost = pl.CostEstimate(
        flops=6 * n_valid,
        transcendentals=2 * n_valid,
        bytes_accessed=n_valid * (pred.dtype.itemsize + label.dtype.itemsize)
        + num_splits * acc_chains * SUBLANES * LANES * 4,
    )

    partials = pl.pallas_call(
        kernel,
        out_shape=jax.ShapeDtypeStruct((num_splits, acc_chains, SUBLANES, LANES), jnp.float32),
        grid=(num_splits, tiles_per_split),
        in_specs=[
            pl.BlockSpec((block_rows, LANES), in_map),
            pl.BlockSpec((block_rows, LANES), in_map),
        ],
        out_specs=pl.BlockSpec((1, acc_chains, SUBLANES, LANES), lambda c, i: (c, 0, 0, 0)),
        compiler_params=pltpu.CompilerParams(dimension_semantics=dims),
        cost_estimate=cost,
    )(pred2d, label2d)

    # Tiny finalize (num_splits*acc_chains*1024 elements): cross-lane reduce + mean in XLA.
    # NOTE: per-lane-slot accumulation is f32; for >~1e10 elements consider pairwise /
    # compensated accumulation (typical loss-sized inputs stay well within tolerance).
    return jnp.sum(partials) / jnp.float32(n_valid)


def _reference_loss(pred, label):
    pred, label = _align_pred_label_batch_size(pred, label)
    x = pred.astype(jnp.float32)
    y = label.astype(jnp.float32)
    loss = jnp.maximum(x, 0.0) - x * y + jnp.log1p(jnp.exp(-jnp.abs(x)))
    return jnp.mean(loss)


if __name__ == "__main__":
    key = jax.random.PRNGKey(0)
    k_pred, k_label, k_pred2, k_label2, k_pred3, k_label3 = jax.random.split(key, 6)

    # 1) NCHW-like logits and binary {0,1} float labels (128-aligned -> pure no-copy path).
    pred = jax.random.normal(k_pred, (2, 4, 16, 16), dtype=jnp.float32)
    label = jax.random.bernoulli(k_label, 0.5, (2, 4, 16, 16)).astype(jnp.float32)
    loss = jax.block_until_ready(bce_with_logits_loss(pred, label))
    ref = jax.block_until_ready(_reference_loss(pred, label))
    assert loss.shape == ()
    assert jnp.allclose(loss, ref, rtol=1e-5, atol=1e-5), (loss, ref)

    # 2) Ragged-last-tile mask, partial-block DMA, multi-tile grid with small blocks.
    pred2 = jax.random.normal(k_pred2, (5, 8, 16, 16), dtype=jnp.float32)
    label2 = jax.random.bernoulli(k_label2, 0.5, (5, 8, 16, 16)).astype(jnp.float32)
    loss2 = jax.block_until_ready(bce_with_logits_loss(pred2, label2, block_rows=32))
    ref2 = jax.block_until_ready(_reference_loss(pred2, label2))
    assert jnp.allclose(loss2, ref2, rtol=1e-5, atol=1e-5), (loss2, ref2)

    # 3) Non-128-aligned element count + mismatched batch (exercises lane pad + truncation).
    pred3 = jax.random.normal(k_pred3, (3, 5, 7), dtype=jnp.float32)
    label3 = jax.random.bernoulli(k_label3, 0.5, (2, 5, 7)).astype(jnp.float32)
    loss3 = jax.block_until_ready(bce_with_logits_loss(pred3, label3))
    ref3 = jax.block_until_ready(_reference_loss(pred3, label3))
    assert jnp.allclose(loss3, ref3, rtol=1e-5, atol=1e-5), (loss3, ref3)

    print("KERNEL_OK")
</pallas_src>

<mosaic_0001>
module attributes {stable_mosaic.version = 11 : i64} {
  func.func @_bce_logits_kernel(%arg0: i32, %arg1: i32, %arg2: memref<16x128xf32, #tpu.memory_space<vmem>>, %arg3: memref<16x128xf32, #tpu.memory_space<vmem>>, %arg4: memref<1x2x8x128xf32, #tpu.memory_space<vmem>>) attributes {dimension_semantics = [#tpu.dimension_semantics<arbitrary>, #tpu.dimension_semantics<arbitrary>], iteration_bounds = array<i64: 1, 1>, scalar_prefetch = 0 : i64, scratch_operands = 0 : i64, tpu.core_type = #tpu.core_type<tc>, window_params = [{transform_indices = @transform_0, window_bounds = array<i64: 16, 128>}, {transform_indices = @transform_1, window_bounds = array<i64: 16, 128>}, {transform_indices = @transform_2, window_bounds = array<i64: 1, 2, 8, 128>}]} {
    %c0_i32 = arith.constant 0 : i32
    %0 = arith.cmpi eq, %arg1, %c0_i32 : i32
    %1 = arith.extui %0 : i1 to i32
    %c0_i32_0 = arith.constant 0 : i32
    %2 = arith.cmpi ne, %1, %c0_i32_0 : i32
    scf.if %2 {
      %cst_14 = arith.constant 0.000000e+00 : f32
      %21 = vector.broadcast %cst_14 : f32 to vector<1x2x8x128xf32>
      %c0_15 = arith.constant 0 : index
      %c0_16 = arith.constant 0 : index
      %c0_17 = arith.constant 0 : index
      %c0_18 = arith.constant 0 : index
      %22 = vector.load %arg4[%c0_15, %c0_16, %c0_17, %c0_18] : memref<1x2x8x128xf32, #tpu.memory_space<vmem>>, vector<1x2x8x128xf32>
      tpu.vector_store %arg4[%c0_15, %c0_16, %c0_17, %c0_18], %21 {strides = array<i32>} : memref<1x2x8x128xf32, #tpu.memory_space<vmem>>, vector<1x2x8x128xf32>,
    } else {
    }
    %c0 = arith.constant 0 : index
    %c0_1 = arith.constant 0 : index
    %3 = vector.load %arg2[%c0, %c0_1] : memref<16x128xf32, #tpu.memory_space<vmem>>, vector<16x128xf32>
    %c0_2 = arith.constant 0 : index
    %c0_3 = arith.constant 0 : index
    %4 = vector.load %arg3[%c0_2, %c0_3] : memref<16x128xf32, #tpu.memory_space<vmem>>, vector<16x128xf32>
    %5 = math.absf %3 : vector<16x128xf32>
    %cst = arith.constant 0.000000e+00 : f32
    %6 = vector.broadcast %cst : f32 to vector<16x128xf32>
    %7 = arith.subf %6, %5 : vector<16x128xf32>
    %8 = math.exp %7 : vector<16x128xf32>
    %9 = math.log1p %8 : vector<16x128xf32>
    %cst_4 = arith.constant 0.000000e+00 : f32
    %10 = vector.broadcast %cst_4 : f32 to vector<16x128xf32>
    %11 = arith.maximumf %3, %10 : vector<16x128xf32>
    %12 = arith.mulf %3, %4 : vector<16x128xf32>
    %13 = arith.subf %11, %12 : vector<16x128xf32>
    %14 = arith.addf %13, %9 : vector<16x128xf32>
    %15 = vector.shape_cast %14 : vector<16x128xf32> to vector<2x1x8x128xf32>
    %cst_5 = arith.constant dense<0.000000e+00> : vector<2x8x128xf32>
    %16 = vector.multi_reduction <add>, %15, %cst_5 [1] : vector<2x1x8x128xf32> to vector<2x8x128xf32>
    %c0_6 = arith.constant 0 : index
    %c0_7 = arith.constant 0 : index
    %c0_8 = arith.constant 0 : index
    %c0_9 = arith.constant 0 : index
    %17 = vector.load %arg4[%c0_6, %c0_7, %c0_8, %c0_9] : memref<1x2x8x128xf32, #tpu.memory_space<vmem>>, vector<1x2x8x128xf32>
    %18 = vector.shape_cast %16 : vector<2x8x128xf32> to vector<1x2x8x128xf32>
    %19 = arith.addf %17, %18 : vector<1x2x8x128xf32>
    %c0_10 = arith.constant 0 : index
    %c0_11 = arith.constant 0 : index
    %c0_12 = arith.constant 0 : index
    %c0_13 = arith.constant 0 : index
    %20 = vector.load %arg4[%c0_10, %c0_11, %c0_12, %c0_13] : memref<1x2x8x128xf32, #tpu.memory_space<vmem>>, vector<1x2x8x128xf32>
    tpu.vector_store %arg4[%c0_10, %c0_11, %c0_12, %c0_13], %19 {strides = array<i32>} : memref<1x2x8x128xf32, #tpu.memory_space<vmem>>, vector<1x2x8x128xf32>,
    return
  }
  func.func @transform_0(%arg0: i32, %arg1: i32) -> (i32, i32) {
    %c1_i32 = arith.constant 1 : i32
    %0 = arith.muli %arg0, %c1_i32 : i32
    %1 = arith.addi %0, %arg1 : i32
    %c0_i32 = arith.constant 0 : i32
    %c0_i32_0 = arith.constant 0 : i32
    return %1, %c0_i32 : i32, i32
  }
  func.func @transform_1(%arg0: i32, %arg1: i32) -> (i32, i32) {
    %c1_i32 = arith.constant 1 : i32
    %0 = arith.muli %arg0, %c1_i32 : i32
    %1 = arith.addi %0, %arg1 : i32
    %c0_i32 = arith.constant 0 : i32
    %c0_i32_0 = arith.constant 0 : i32
    return %1, %c0_i32 : i32, i32
  }
  func.func @transform_2(%arg0: i32, %arg1: i32) -> (i32, i32, i32, i32) {
    %c0_i32 = arith.constant 0 : i32
    %c0_i32_0 = arith.constant 0 : i32
    %c0_i32_1 = arith.constant 0 : i32
    %c0_i32_2 = arith.constant 0 : i32
    return %arg0, %c0_i32, %c0_i32_0, %c0_i32_1 : i32, i32, i32, i32
  }
}

</mosaic_0001>

<llo_original>
// kernel: tpu_custom_call.1
$region0: #{tpu_custom_call.1}
  #allocation0 [shape = 'u32[]', space=smem, size = 0x4, offset = 0x4, fixed_abs, tag = 'smem constant byte address 0x4 - core index']
  #allocation1 [shape = 'u32[144,128]{1,0:T(1,128)}', space=vmem, size = 0x12000, scoped, tag = 'internal scratch']
  %s0 = inlined_call_operand.hbm [shape: f32[16,128], index: 0, kind: input, shape index: {}]
  %s1 = inlined_call_operand.hbm [shape: f32[16,128], index: 1, kind: input, shape index: {}]
  %s2 = inlined_call_operand.hbm [shape: f32[1,2,8,128], index: 2, kind: output, shape index: {}]
  %s3 = sld [smem:[#allocation0]]
  $region30: #{tpu_custom_call.1} parent=0
    _
  %s5 = ssub.s32 1, %s3
  %s6 = scalar_select 0, %s5, %s3
  $region1: #{tpu_custom_call.1} parent=0
    #allocation2 [shape = 'u8[8192]{0}', space=vmem, size = 0x2000, scoped, tag = 'input window, operand 0, single buffered']
    #allocation3 [shape = 's32[1]{0}', space=sflag, size = 0x4, scoped, tag = 'scoped memory for tpu_custom_call.1']
    #allocation4 [shape = 's32[1]{0}', space=sflag, size = 0x4, scoped, tag = 'scoped memory for tpu_custom_call.1']
    #allocation5 [shape = 'u8[8192]{0}', space=vmem, size = 0x2000, scoped, tag = 'input window, operand 1, single buffered']
    #allocation6 [shape = 's32[1]{0}', space=sflag, size = 0x4, scoped, tag = 'scoped memory for tpu_custom_call.1']
    #allocation7 [shape = 'u8[8192]{0}', space=vmem, size = 0x2000, scoped, tag = 'output window, operand 0, single buffered']
    %7 = vsyncpa [#allocation3], 0
    %8 = vsyncpa [#allocation6], 0
    %9 = vsyncpa [#allocation4], 0
    // Predicated region
    $region2: #{tpu_custom_call.1} parent=1 // pred_check
      _
    $region3: #{tpu_custom_call.1} parent=1 // pred_check_branch
      %11 = sbr.rel (0) target = $region5
    $region4: #{tpu_custom_call.1} parent=1 // pred_region
      %s12 = sadd.s32 0, 0
      %s13 = smul.u32 2, %s12
      %s15 = ssub.s32 256, 256
      %16 = vsyncadd [#allocation3], %s15
      %s17 = smul.addr %s13, 128
      %s18 = scalar_lea.hbm %s0, %s17
      %s19 = sshll.u32 [#allocation2], 4
      %s20 = int_to_ptr.vmem [resolvable:$true] %s19
      %25 = dma.hbm_to_vmem [thread:$0]  %s18, 256, %s20, [#allocation3], 128, 128, 8
    $region5: #{tpu_custom_call.1} parent=1 // pred_fallthru
      _
    // Predicated region
    $region6: #{tpu_custom_call.1} parent=1 // pred_check
      _
    $region7: #{tpu_custom_call.1} parent=1 // pred_check_branch
      %27 = sbr.rel (0) target = $region9
    $region8: #{tpu_custom_call.1} parent=1 // pred_region
      %s28 = sadd.s32 0, 0
      %s29 = smul.u32 2, %s28
      %s31 = ssub.s32 256, 256
      %32 = vsyncadd [#allocation6], %s31
      %s33 = smul.addr %s29, 128
      %s34 = scalar_lea.hbm %s1, %s33
      %s35 = sshll.u32 [#allocation5], 4
      %s36 = int_to_ptr.vmem [resolvable:$true] %s35
      %41 = dma.hbm_to_vmem [thread:$0]  %s34, 256, %s36, [#allocation6], 128, 128, 8
    $region9: #{tpu_custom_call.1} parent=1 // pred_fallthru
      _
    // Predicated region
    $region10: #{tpu_custom_call.1} parent=1 // pred_check
      _
    $region11: #{tpu_custom_call.1} parent=1 // pred_check_branch
      %43 = sbr.rel (0) target = $region13
    $region12: #{tpu_custom_call.1} parent=1 // pred_region
      %44 = dma.done [#allocation3], 256
    $region13: #{tpu_custom_call.1} parent=1 // pred_fallthru
      _
    // Predicated region
    $region14: #{tpu_custom_call.1} parent=1 // pred_check
      _
    $region15: #{tpu_custom_call.1} parent=1 // pred_check_branch
      %46 = sbr.rel (0) target = $region17
    $region16: #{tpu_custom_call.1} parent=1 // pred_region
      %47 = dma.done [#allocation6], 256
    $region17: #{tpu_custom_call.1} parent=1 // pred_fallthru
      _
    %s48 = sadd.s32 0, 0
    %s49 = smul.u32 2, %s48
    %s50 = sadd.s32 0, 0
    %s51 = smul.u32 2, %s50
    %p52 = scmp.eq.s32.totalorder 0, 0
    // Predicated region
    $region18: #{tpu_custom_call.1} parent=1 // pred_check
      %p53 = pneg %p52
    $region19: #{tpu_custom_call.1} parent=1 // pred_check_branch
      %55 = sbr.rel (%p53) target = $region21
    $region20: #{tpu_custom_call.1} parent=1 // pred_region
      %56 = vst [vmem:[#allocation7] sm:$0xff] 0.0
      %57 = vst [vmem:[#allocation7 + $0x8] sm:$0xff] 0.0
    $region21: #{tpu_custom_call.1} parent=1 // pred_fallthru
      _
    %v58 = vld [vmem:[#allocation2] sm:$0xff]
    %v59 = vld [vmem:[#allocation2 + $0x8] sm:$0xff]
    %v60 = vld [vmem:[#allocation5] sm:$0xff]
    %v61 = vld [vmem:[#allocation5 + $0x8] sm:$0xff]
    %v62 = vand.u32 2147483647, %v58
    %v63 = vand.u32 2147483647, %v59
    %v64 = vsub.f32 0.0, %v62
    %v65 = vsub.f32 0.0, %v63
    %v66 = vmul.f32 %v64, 1.442695
    %v67 = vpow.pop %v66
    %v68 = vmul.f32 %v65, 1.442695
    %v69 = vpow.pop %v68
    %v70 = vadd.f32 %v67, 1.0
    %v71 = vlog2.pop %v70
    %v72 = vmul.f32 %v71, 0.6931472
    %v73 = vmul.f32 -0.5, %v67
    %v74 = vadd.f32 %v73, 1.0
    %v75 = vmul.f32 %v74, %v67
    %v76 = vand.u32 2147483647, %v67
    %vm77 = vcmp.lt.f32.partialorder %v76, 0.0004427343
    %v78 = vsel %vm77, %v75, %v72
    %v79 = vadd.f32 %v69, 1.0
    %v80 = vlog2.pop %v79
    %v81 = vmul.f32 %v80, 0.6931472
    %v82 = vmul.f32 -0.5, %v69
    %v83 = vadd.f32 %v82, 1.0
    %v84 = vmul.f32 %v83, %v69
    %v85 = vand.u32 2147483647, %v69
    %vm86 = vcmp.lt.f32.partialorder %v85, 0.0004427343
    %v87 = vsel %vm86, %v84, %v81
    %v88 = vmax.f32 %v58, 0.0
    %v89 = vmax.f32 %v59, 0.0
    %v90 = vmul.f32 %v58, %v60
    %v91 = vmul.f32 %v59, %v61
    %v92 = vsub.f32 %v88, %v90
    %v93 = vsub.f32 %v89, %v91
    %v94 = vadd.f32 %v92, %v78
    %v95 = vadd.f32 %v93, %v87
    %v96 = vadd.f32 %v94, 0.0
    %v97 = vadd.f32 %v95, 0.0
    %v98 = vld [vmem:[#allocation7] sm:$0xff]
    %v99 = vld [vmem:[#allocation7 + $0x8] sm:$0xff]
    %v100 = vadd.f32 %v98, %v96
    %v101 = vadd.f32 %v99, %v97
    %102 = vst [vmem:[#allocation7] sm:$0xff] %v100
    %103 = vst [vmem:[#allocation7 + $0x8] sm:$0xff] %v101
    // Predicated region
    $region22: #{tpu_custom_call.1} parent=1 // pred_check
      _
    $region23: #{tpu_custom_call.1} parent=1 // pred_check_branch
      %105 = sbr.rel (0) target = $region25
    $region24: #{tpu_custom_call.1} parent=1 // pred_region
      %s107 = ssub.s32 256, 256
      %108 = vsyncadd [#allocation4], %s107
      %s109 = sshll.u32 [#allocation7], 4
      %s110 = int_to_ptr.vmem [resolvable:$true] %s109
      %115 = dma.vmem_to_hbm [thread:$0]  %s110, 256, %s2, [#allocation4], 128, 128, 8
    $region25: #{tpu_custom_call.1} parent=1 // pred_fallthru
      _
    // Predicated region
    $region26: #{tpu_custom_call.1} parent=1 // pred_check
      _
    $region27: #{tpu_custom_call.1} parent=1 // pred_check_branch
      %117 = sbr.rel (0) target = $region29
    $region28: #{tpu_custom_call.1} parent=1 // pred_region
      %118 = dma.done [#allocation4], 256
    $region29: #{tpu_custom_call.1} parent=1 // pred_fallthru
      _
    %119 = vsyncpa [#allocation3], 1
    %120 = vsyncpa [#allocation6], 1
    %121 = vsyncpa [#allocation4], 1

</llo_original>
